<compile_context>
chip_gen: v7x
topology: tpu7x:2x2x1
jax: 0.10.0
libtpu: 0.0.40
codegen_flags: <defaults>
</compile_context>

<pallas_src>
import math

import jax
import jax.numpy as jnp
from jax import lax
from jax.experimental import pallas as pl
from jax.experimental.pallas import tpu as pltpu


def _neuron_pool_kernel(q_ref, k_ref, x_ref, scale_ref, bias_ref, out_ref):
    # q_ref:(tq,D)  k_ref:(M,D)  x_ref:(B,M)  scale_ref/bias_ref:(1,tq)  out_ref:(B,tq)
    d = q_ref.shape[-1]
    inv_sqrt_d = jnp.asarray(1.0 / math.sqrt(d), dtype=q_ref.dtype)

    # Apply the 1/sqrt(D) scale to the small (tq, D) operand, not the (tq, M) scores.
    q = q_ref[...] * inv_sqrt_d
    k = k_ref[...]

    # scores[n, m] = <q_n, k_m>: contract D of both operands, no transpose.
    scores = lax.dot_general(
        q, k,
        dimension_numbers=(((1,), (1,)), ((), ())),
        preferred_element_type=jnp.float32,
    )  # (tq, M), f32

    # Numerically-stable softmax over the key axis (M); elementwise math in f32.
    m_max = jnp.max(scores, axis=-1, keepdims=True)
    p = jnp.exp(scores - m_max)
    denom = jnp.sum(p, axis=-1, keepdims=True)
    attn = p * pl.reciprocal(denom, approx=True)  # (tq, M); EUP reciprocal

    # axon[b, n] = sum_m x[b, m] * attn[n, m]: contract M of both, no transpose.
    axon = lax.dot_general(
        x_ref[...].astype(attn.dtype), attn,
        dimension_numbers=(((1,), (1,)), ((), ())),
        preferred_element_type=jnp.float32,
    )  # (B, tq)  -- lane-dense output tile

    # linear transform: bias + scale * axon  (broadcast (1,tq) over batch)
    out_ref[...] = (bias_ref[...] + scale_ref[...] * axon).astype(out_ref.dtype)


def neuron_pool_forward(q_sel, input_embeddings, inputs, scale_sel, bias_sel, *, tq=128):
    """q_sel:(N,D), input_embeddings:(M,D), inputs:(B,M), scale_sel/bias_sel:(N,)."""
    B, M = inputs.shape
    N, D = q_sel.shape
    assert input_embeddings.shape == (M, D)

    # Pad N up to a multiple of the query tile so the output last dim is
    # lane-dense (multiple of 128). Padded rows need no masking: softmax is
    # per-row and padded outputs are sliced off below.
    n_pad = pl.cdiv(N, tq) * tq
    pad = n_pad - N
    q_p = jnp.pad(q_sel, ((0, pad), (0, 0)))
    scale_p = jnp.pad(scale_sel.astype(jnp.float32), (0, pad)).reshape(1, n_pad)
    bias_p = jnp.pad(bias_sel.astype(jnp.float32), (0, pad)).reshape(1, n_pad)

    grid = (n_pad // tq,)

    itemsize = 4
    cost = pl.CostEstimate(
        flops=2 * n_pad * M * D + 2 * B * n_pad * M,
        transcendentals=n_pad * M,
        bytes_accessed=itemsize * (n_pad * D + M * D + B * M + 2 * n_pad + B * n_pad),
    )

    out = pl.pallas_call(
        _neuron_pool_kernel,
        out_shape=jax.ShapeDtypeStruct((B, n_pad), jnp.float32),
        grid_spec=pltpu.PrefetchScalarGridSpec(
            num_scalar_prefetch=0,
            grid=grid,
            in_specs=[
                pl.BlockSpec((tq, D), lambda i: (i, 0)),   # q tile (pipelined)
                pl.BlockSpec((M, D), lambda i: (0, 0)),    # k resident
                pl.BlockSpec((B, M), lambda i: (0, 0)),    # x resident
                pl.BlockSpec((1, tq), lambda i: (0, i)),   # scale tile
                pl.BlockSpec((1, tq), lambda i: (0, i)),   # bias tile
            ],
            out_specs=pl.BlockSpec((B, tq), lambda i: (0, i)),
        ),
        compiler_params=pltpu.CompilerParams(
            dimension_semantics=("parallel",),  # independent over neuron tiles
        ),
        cost_estimate=cost,
    )(q_p, input_embeddings, inputs, scale_p, bias_p)

    return out[:, :N], None


def reference_forward(q_sel, input_embeddings, inputs, scale_sel, bias_sel):
    d = q_sel.shape[-1]
    scores = (q_sel @ input_embeddings.T) / math.sqrt(d)
    attn = jax.nn.softmax(scores, axis=-1)
    axon = inputs @ attn.T
    return bias_sel[None, :] + scale_sel[None, :] * axon


if __name__ == "__main__":
    key = jax.random.PRNGKey(0)

    # Module config (synthetic, deterministic init — no checkpoint load).
    n_neurons = 10          # total keys in the pool
    embedding_dim = 32      # D
    n_inputs = 16           # M (number of input genes)
    batch = 4               # B
    n_selected = 8          # N (subset of keys requested in forward)

    k_emb, k_in, k_iemb = jax.random.split(key, 3)

    # dendrite_embeddings: kaiming_uniform_(mode='fan_in') -> U(-b, b), b = sqrt(6/fan_in)
    bound = math.sqrt(6.0 / embedding_dim)
    dendrite_embeddings = jax.random.uniform(
        k_emb, (n_neurons, embedding_dim), minval=-bound, maxval=bound,
        dtype=jnp.float32,
    )
    # scale ~ U(1,1) == 1, bias = 0
    scale = jnp.ones((n_neurons,), jnp.float32)
    bias = jnp.zeros((n_neurons,), jnp.float32)

    # Key -> index mapping (equivalent of the pandas DataFrame lookup; host-side glue).
    all_keys = [f"gene_{i}" for i in range(n_neurons)]
    mapping = {kk: i for i, kk in enumerate(all_keys)}
    selected_keys = all_keys[:n_selected]
    indices = jnp.array([mapping[kk] for kk in selected_keys], dtype=jnp.int32)

    # Forward inputs: (inputs, input_embeddings) pair.
    inputs = jax.random.normal(k_in, (batch, n_inputs), dtype=jnp.float32)
    input_embeddings = jax.random.normal(
        k_iemb, (n_inputs, embedding_dim), dtype=jnp.float32
    )

    # Glue: selection / gather by key indices (plain JAX).
    q_sel = dendrite_embeddings[indices]
    scale_sel = scale[indices]
    bias_sel = bias[indices]

    axon_outputs, _ = neuron_pool_forward(
        q_sel, input_embeddings, inputs, scale_sel, bias_sel
    )
    axon_outputs = jax.block_until_ready(axon_outputs)

    ref = reference_forward(q_sel, input_embeddings, inputs, scale_sel, bias_sel)
    assert axon_outputs.shape == (batch, n_selected)
    # Tolerance loosened slightly for the approx (EUP) reciprocal in the softmax.
    assert jnp.allclose(axon_outputs, ref, atol=2e-3, rtol=2e-3)

    print("KERNEL_OK")
</pallas_src>

<mosaic_0001>
module attributes {stable_mosaic.version = 11 : i64} {
  func.func @_neuron_pool_kernel(%arg0: i32, %arg1: memref<128x32xf32, #tpu.memory_space<vmem>>, %arg2: memref<16x32xf32, #tpu.memory_space<vmem>>, %arg3: memref<4x16xf32, #tpu.memory_space<vmem>>, %arg4: memref<1x128xf32, #tpu.memory_space<vmem>>, %arg5: memref<1x128xf32, #tpu.memory_space<vmem>>, %arg6: memref<4x128xf32, #tpu.memory_space<vmem>>) attributes {dimension_semantics = [#tpu.dimension_semantics<parallel>], iteration_bounds = array<i64: 1>, scalar_prefetch = 0 : i64, scratch_operands = 0 : i64, tpu.core_type = #tpu.core_type<tc>, window_params = [{transform_indices = @transform_0, window_bounds = array<i64: 128, 32>}, {pipeline_mode = #tpu.pipeline_mode<synchronous>, transform_indices = @transform_1, window_bounds = array<i64: 16, 32>}, {pipeline_mode = #tpu.pipeline_mode<synchronous>, transform_indices = @transform_2, window_bounds = array<i64: 4, 16>}, {transform_indices = @transform_3, window_bounds = array<i64: 1, 128>}, {transform_indices = @transform_4, window_bounds = array<i64: 1, 128>}, {transform_indices = @transform_5, window_bounds = array<i64: 4, 128>}]} {
    %c0 = arith.constant 0 : index
    %c0_0 = arith.constant 0 : index
    %0 = vector.load %arg1[%c0, %c0_0] : memref<128x32xf32, #tpu.memory_space<vmem>>, vector<128x32xf32>
    %cst = arith.constant 0.176776692 : f32
    %1 = vector.broadcast %cst : f32 to vector<128x32xf32>
    %2 = arith.mulf %0, %1 : vector<128x32xf32>
    %c0_1 = arith.constant 0 : index
    %c0_2 = arith.constant 0 : index
    %3 = vector.load %arg2[%c0_1, %c0_2] : memref<16x32xf32, #tpu.memory_space<vmem>>, vector<16x32xf32>
    %cst_3 = arith.constant dense<0.000000e+00> : vector<128x16xf32>
    %4 = tpu.matmul %2, %3, %cst_3 {dimension_numbers = #tpu.dot_dimension_numbers<[1], [1], [0], [0], [0, 0, 1, 0], [], []>} : vector<128x32xf32>, vector<16x32xf32>, vector<128x16xf32> -> vector<128x16xf32>
    %cst_4 = arith.constant dense<0xFF800000> : vector<128xf32>
    %5 = vector.multi_reduction <maximumf>, %4, %cst_4 [1] : vector<128x16xf32> to vector<128xf32>
    %6 = vector.shape_cast %5 : vector<128xf32> to vector<128x1xf32>
    %7 = vector.broadcast %6 : vector<128x1xf32> to vector<128x16xf32>
    %8 = arith.subf %4, %7 : vector<128x16xf32>
    %9 = math.exp %8 : vector<128x16xf32>
    %cst_5 = arith.constant dense<0.000000e+00> : vector<128xf32>
    %10 = vector.multi_reduction <add>, %9, %cst_5 [1] : vector<128x16xf32> to vector<128xf32>
    %11 = vector.shape_cast %10 : vector<128xf32> to vector<128x1xf32>
    %12 = tpu.reciprocal %11 {approx = true} : vector<128x1xf32> -> vector<128x1xf32>
    %13 = vector.broadcast %12 : vector<128x1xf32> to vector<128x16xf32>
    %14 = arith.mulf %9, %13 : vector<128x16xf32>
    %c0_6 = arith.constant 0 : index
    %c0_7 = arith.constant 0 : index
    %15 = vector.load %arg3[%c0_6, %c0_7] : memref<4x16xf32, #tpu.memory_space<vmem>>, vector<4x16xf32>
    %cst_8 = arith.constant dense<0.000000e+00> : vector<4x128xf32>
    %16 = tpu.matmul %15, %14, %cst_8 {dimension_numbers = #tpu.dot_dimension_numbers<[1], [1], [0], [0], [0, 0, 1, 0], [], []>} : vector<4x16xf32>, vector<128x16xf32>, vector<4x128xf32> -> vector<4x128xf32>
    %c0_9 = arith.constant 0 : index
    %c0_10 = arith.constant 0 : index
    %17 = vector.load %arg5[%c0_9, %c0_10] : memref<1x128xf32, #tpu.memory_space<vmem>>, vector<1x128xf32>
    %c0_11 = arith.constant 0 : index
    %c0_12 = arith.constant 0 : index
    %18 = vector.load %arg4[%c0_11, %c0_12] : memref<1x128xf32, #tpu.memory_space<vmem>>, vector<1x128xf32>
    %19 = vector.broadcast %18 : vector<1x128xf32> to vector<4x128xf32>
    %20 = arith.mulf %19, %16 : vector<4x128xf32>
    %21 = vector.broadcast %17 : vector<1x128xf32> to vector<4x128xf32>
    %22 = arith.addf %21, %20 : vector<4x128xf32>
    %c0_13 = arith.constant 0 : index
    %c0_14 = arith.constant 0 : index
    %23 = vector.load %arg6[%c0_13, %c0_14] : memref<4x128xf32, #tpu.memory_space<vmem>>, vector<4x128xf32>
    tpu.vector_store %arg6[%c0_13, %c0_14], %22 {strides = array<i32>} : memref<4x128xf32, #tpu.memory_space<vmem>>, vector<4x128xf32>,
    return
  }
  func.func @transform_0(%arg0: i32) -> (i32, i32) {
    %c0_i32 = arith.constant 0 : i32
    %c0_i32_0 = arith.constant 0 : i32
    return %arg0, %c0_i32 : i32, i32
  }
  func.func @transform_1(%arg0: i32) -> (i32, i32) {
    %c0_i32 = arith.constant 0 : i32
    %c0_i32_0 = arith.constant 0 : i32
    %c0_i32_1 = arith.constant 0 : i32
    return %c0_i32, %c0_i32_0 : i32, i32
  }
  func.func @transform_2(%arg0: i32) -> (i32, i32) {
    %c0_i32 = arith.constant 0 : i32
    %c0_i32_0 = arith.constant 0 : i32
    %c0_i32_1 = arith.constant 0 : i32
    return %c0_i32, %c0_i32_0 : i32, i32
  }
  func.func @transform_3(%arg0: i32) -> (i32, i32) {
    %c0_i32 = arith.constant 0 : i32
    %c0_i32_0 = arith.constant 0 : i32
    return %c0_i32, %arg0 : i32, i32
  }
  func.func @transform_4(%arg0: i32) -> (i32, i32) {
    %c0_i32 = arith.constant 0 : i32
    %c0_i32_0 = arith.constant 0 : i32
    return %c0_i32, %arg0 : i32, i32
  }
  func.func @transform_5(%arg0: i32) -> (i32, i32) {
    %c0_i32 = arith.constant 0 : i32
    %c0_i32_0 = arith.constant 0 : i32
    return %c0_i32, %arg0 : i32, i32
  }
}

</mosaic_0001>

<llo_original>
// kernel: tpu_custom_call.1
$region0: #{tpu_custom_call.1}
  #allocation0 [shape = 'u32[]', space=smem, size = 0x4, offset = 0x4, fixed_abs, tag = 'smem constant byte address 0x4 - core index']
  #allocation1 [shape = 'u32[144,128]{1,0:T(1,128)}', space=vmem, size = 0x12000, scoped, tag = 'internal scratch']
  %s0 = inlined_call_operand.vmem [shape: f32[128,32], index: 0, kind: input, shape index: {}]
  %s1 = inlined_call_operand.vmem [shape: f32[16,32], index: 1, kind: input, shape index: {}]
  %s2 = inlined_call_operand.vmem [shape: f32[4,16], index: 2, kind: input, shape index: {}]
  %s3 = inlined_call_operand.vmem [shape: f32[1,128], index: 3, kind: input, shape index: {}]
  %s4 = inlined_call_operand.vmem [shape: f32[1,128], index: 4, kind: input, shape index: {}]
  %s5 = inlined_call_operand.hbm [shape: f32[4,128], index: 5, kind: output, shape index: {}]
  %s6 = sld [smem:[#allocation0]]
  $region30: #{tpu_custom_call.1} parent=0
    _
  %s8 = ssub.s32 1, %s6
  %s9 = scalar_select 0, %s8, %s6
  $region1: #{tpu_custom_call.1} parent=0
    #allocation2 [shape = 'u8[2048]{0}', space=vmem, size = 0x800, scoped, tag = 'output window, operand 0, single buffered']
    #allocation3 [shape = 's32[1]{0}', space=sflag, size = 0x4, scoped, tag = 'scoped memory for tpu_custom_call.1']
    %10 = vsyncpa [#allocation3], 0
    // Predicated region
    $region2: #{tpu_custom_call.1} parent=1 // pred_check
      _
    $region3: #{tpu_custom_call.1} parent=1 // pred_check_branch
      %12 = sbr.rel (0) target = $region5
    $region4: #{tpu_custom_call.1} parent=1 // pred_region
      _
    $region5: #{tpu_custom_call.1} parent=1 // pred_fallthru
      _
    // Predicated region
    $region6: #{tpu_custom_call.1} parent=1 // pred_check
      _
    $region7: #{tpu_custom_call.1} parent=1 // pred_check_branch
      %14 = sbr.rel (0) target = $region9
    $region8: #{tpu_custom_call.1} parent=1 // pred_region
      _
    $region9: #{tpu_custom_call.1} parent=1 // pred_fallthru
      _
    // Predicated region
    $region10: #{tpu_custom_call.1} parent=1 // pred_check
      _
    $region11: #{tpu_custom_call.1} parent=1 // pred_check_branch
      %16 = sbr.rel (0) target = $region13
    $region12: #{tpu_custom_call.1} parent=1 // pred_region
      _
    $region13: #{tpu_custom_call.1} parent=1 // pred_fallthru
      _
    // Predicated region
    $region14: #{tpu_custom_call.1} parent=1 // pred_check
      _
    $region15: #{tpu_custom_call.1} parent=1 // pred_check_branch
      %18 = sbr.rel (0) target = $region17
    $region16: #{tpu_custom_call.1} parent=1 // pred_region
      _
    $region17: #{tpu_custom_call.1} parent=1 // pred_fallthru
      _
    // Predicated region
    $region18: #{tpu_custom_call.1} parent=1 // pred_check
      _
    $region19: #{tpu_custom_call.1} parent=1 // pred_check_branch
      %20 = sbr.rel (0) target = $region21
    $region20: #{tpu_custom_call.1} parent=1 // pred_region
      _
    $region21: #{tpu_custom_call.1} parent=1 // pred_fallthru
      _
    %v21 = vld [vmem:[%s0] sm:$0xff]
    %v22 = vld [vmem:[%s0 + $0x8] sm:$0xff]
    %v23 = vld [vmem:[%s0 + $0x10] sm:$0xff]
    %v24 = vld [vmem:[%s0 + $0x18] sm:$0xff]
    %v25 = vld [vmem:[%s0 + $0x20] sm:$0xff]
    %v26 = vld [vmem:[%s0 + $0x28] sm:$0xff]
    %v27 = vld [vmem:[%s0 + $0x30] sm:$0xff]
    %v28 = vld [vmem:[%s0 + $0x38] sm:$0xff]
    %v29 = vld [vmem:[%s0 + $0x40] sm:$0xff]
    %v30 = vld [vmem:[%s0 + $0x48] sm:$0xff]
    %v31 = vld [vmem:[%s0 + $0x50] sm:$0xff]
    %v32 = vld [vmem:[%s0 + $0x58] sm:$0xff]
    %v33 = vld [vmem:[%s0 + $0x60] sm:$0xff]
    %v34 = vld [vmem:[%s0 + $0x68] sm:$0xff]
    %v35 = vld [vmem:[%s0 + $0x70] sm:$0xff]
    %v36 = vld [vmem:[%s0 + $0x78] sm:$0xff]
    %v37 = vmul.f32 %v21, 0.17677669
    %v38 = vmul.f32 %v22, 0.17677669
    %v39 = vmul.f32 %v23, 0.17677669
    %v40 = vmul.f32 %v24, 0.17677669
    %v41 = vmul.f32 %v25, 0.17677669
    %v42 = vmul.f32 %v26, 0.17677669
    %v43 = vmul.f32 %v27, 0.17677669
    %v44 = vmul.f32 %v28, 0.17677669
    %v45 = vmul.f32 %v29, 0.17677669
    %v46 = vmul.f32 %v30, 0.17677669
    %v47 = vmul.f32 %v31, 0.17677669
    %v48 = vmul.f32 %v32, 0.17677669
    %v49 = vmul.f32 %v33, 0.17677669
    %v50 = vmul.f32 %v34, 0.17677669
    %v51 = vmul.f32 %v35, 0.17677669
    %v52 = vmul.f32 %v36, 0.17677669
    %v53 = vld [vmem:[%s1] sm:$0xff]
    %v54 = vld [vmem:[%s1 + $0x8] sm:$0xff]
    %vm55 = vcmask 261120
    %v57 = vsel %vm55, %v37, 0
    %v60 = vsel %vm55, %v38, 0
    %v63 = vsel %vm55, %v39, 0
    %v66 = vsel %vm55, %v40, 0
    %v69 = vsel %vm55, %v41, 0
    %v72 = vsel %vm55, %v42, 0
    %v75 = vsel %vm55, %v43, 0
    %v78 = vsel %vm55, %v44, 0
    %v81 = vsel %vm55, %v45, 0
    %v84 = vsel %vm55, %v46, 0
    %v87 = vsel %vm55, %v47, 0
    %v90 = vsel %vm55, %v48, 0
    %v93 = vsel %vm55, %v49, 0
    %v96 = vsel %vm55, %v50, 0
    %v99 = vsel %vm55, %v51, 0
    %v102 = vsel %vm55, %v52, 0
    %v105 = vsel %vm55, %v53, 0
    %v108 = vsel %vm55, %v54, 0
    %110 = vmatprep.subr.mxu0 0.0
    %111 = vmatpush1.xpose.msra.mxu0 %v105
    %112 = vmatprep.subr.mxu0 0.0
    %113 = vmatpush1.xpose.msra.mxu0 %v108
    %114 = vmatprep.subr.mxu0 0.0
    %115 = vmatpush1.xpose.msra.mxu0 0.0
    %116 = vmatprep.subr.mxu0 0.0
    %117 = vmatpush1.xpose.msra.mxu0 0.0
    %118 = vmatprep.subr.mxu0 0.0
    %119 = vmatpush1.xpose.msra.mxu0 0.0
    %120 = vmatprep.subr.mxu0 0.0
    %121 = vmatpush1.xpose.msra.mxu0 0.0
    %122 = vmatprep.subr.mxu0 0.0
    %123 = vmatpush1.xpose.msra.mxu0 0.0
    %124 = vmatprep.subr.mxu0 0.0
    %125 = vmatpush1.xpose.msra.mxu0 0.0
    %126 = vmatprep.subr.mxu0 0.0
    %127 = vmatpush1.xpose.msra.mxu0 0.0
    %128 = vmatprep.subr.mxu0 0.0
    %129 = vmatpush1.xpose.msra.mxu0 0.0
    %130 = vmatprep.subr.mxu0 0.0
    %131 = vmatpush1.xpose.msra.mxu0 0.0
    %132 = vmatprep.subr.mxu0 0.0
    %133 = vmatpush1.xpose.msra.mxu0 0.0
    %134 = vmatprep.subr.mxu0 0.0
    %135 = vmatpush1.xpose.msra.mxu0 0.0
    %136 = vmatprep.subr.mxu0 0.0
    %137 = vmatpush1.xpose.msra.mxu0 0.0
    %138 = vmatprep.subr.mxu0 0.0
    %139 = vmatpush1.xpose.msra.mxu0 0.0
    %140 = vmatprep.subr.mxu0 0.0
    %141 = vmatpush1.xpose.msra.mxu0 0.0
    %142 = vmatprep.subr.mxu0 0.0
    %143 = vmatpush1.xpose.msra.mxu0 0.0
    %144 = vmatprep.subr.mxu0 0.0
    %145 = vmatpush1.xpose.msra.mxu0 0.0
    %146 = vmatprep.subr.mxu0 0.0
    %147 = vmatpush1.xpose.msra.mxu0 0.0
    %148 = vmatprep.subr.mxu0 0.0
    %149 = vmatpush1.xpose.msra.mxu0 0.0
    %150 = vmatprep.subr.mxu0 0.0
    %151 = vmatpush1.xpose.msra.mxu0 0.0
    %152 = vmatprep.subr.mxu0 0.0
    %153 = vmatpush1.xpose.msra.mxu0 0.0
    %154 = vmatprep.subr.mxu0 0.0
    %155 = vmatpush1.xpose.msra.mxu0 0.0
    %156 = vmatprep.subr.mxu0 0.0
    %157 = vmatpush1.xpose.msra.mxu0 0.0
    %158 = vmatprep.subr.mxu0 0.0
    %159 = vmatpush1.xpose.msra.mxu0 0.0
    %160 = vmatprep.subr.mxu0 0.0
    %161 = vmatpush1.xpose.msra.mxu0 0.0
    %162 = vmatprep.subr.mxu0 0.0
    %163 = vmatpush1.xpose.msra.mxu0 0.0
    %164 = vmatprep.subr.mxu0 0.0
    %165 = vmatpush1.xpose.msra.mxu0 0.0
    %166 = vmatprep.subr.mxu0 0.0
    %167 = vmatpush1.xpose.msra.mxu0 0.0
    %168 = vmatprep.subr.mxu0 0.0
    %169 = vmatpush1.xpose.msra.mxu0 0.0
    %170 = vmatprep.subr.mxu0 0.0
    %171 = vmatpush1.xpose.msra.mxu0 0.0
    %172 = vmatprep.subr.mxu0 0.0
    %173 = vmatpush1.xpose.msra.mxu0 0.0
    %174 = vmatprep.mubr.f32.mxu0 0.0
    %175 = vmatmul.mubr.f32.gmra.mrb[0].mxu0 %v57
    %v176 = vpop.f32.mrb[0].mxu0
    %v177 = vadd.f32 0.0, %v176
    %v178 = vpop.f32.mrb[0].mxu0
    %179 = vmatprep.mubr.f32.mxu0 0.0
    %180 = vmatmul.mubr.f32.gmra.mrb[0].mxu0 %v60
    %v181 = vpop.f32.mrb[0].mxu0
    %v182 = vadd.f32 0.0, %v181
    %v183 = vpop.f32.mrb[0].mxu0
    %184 = vmatprep.mubr.f32.mxu0 0.0
    %185 = vmatmul.mubr.f32.gmra.mrb[0].mxu0 %v63
    %v186 = vpop.f32.mrb[0].mxu0
    %v187 = vadd.f32 0.0, %v186
    %v188 = vpop.f32.mrb[0].mxu0
    %189 = vmatprep.mubr.f32.mxu0 0.0
    %190 = vmatmul.mubr.f32.gmra.mrb[0].mxu0 %v66
    %v191 = vpop.f32.mrb[0].mxu0
    %v192 = vadd.f32 0.0, %v191
    %v193 = vpop.f32.mrb[0].mxu0
    %194 = vmatprep.mubr.f32.mxu0 0.0
    %195 = vmatmul.mubr.f32.gmra.mrb[0].mxu0 %v69
    %v196 = vpop.f32.mrb[0].mxu0
    %v197 = vadd.f32 0.0, %v196
    %v198 = vpop.f32.mrb[0].mxu0
    %199 = vmatprep.mubr.f32.mxu0 0.0
    %200 = vmatmul.mubr.f32.gmra.mrb[0].mxu0 %v72
    %v201 = vpop.f32.mrb[0].mxu0
    %v202 = vadd.f32 0.0, %v201
    %v203 = vpop.f32.mrb[0].mxu0
    %204 = vmatprep.mubr.f32.mxu0 0.0
    %205 = vmatmul.mubr.f32.gmra.mrb[0].mxu0 %v75
    %v206 = vpop.f32.mrb[0].mxu0
    %v207 = vadd.f32 0.0, %v206
    %v208 = vpop.f32.mrb[0].mxu0
    %209 = vmatprep.mubr.f32.mxu0 0.0
    %210 = vmatmul.mubr.f32.gmra.mrb[0].mxu0 %v78
    %v211 = vpop.f32.mrb[0].mxu0
    %v212 = vadd.f32 0.0, %v211
    %v213 = vpop.f32.mrb[0].mxu0
    %214 = vmatprep.mubr.f32.mxu0 0.0
    %215 = vmatmul.mubr.f32.gmra.mrb[0].mxu0 %v81
    %v216 = vpop.f32.mrb[0].mxu0
    %v217 = vadd.f32 0.0, %v216
    %v218 = vpop.f32.mrb[0].mxu0
    %219 = vmatprep.mubr.f32.mxu0 0.0
    %220 = vmatmul.mubr.f32.gmra.mrb[0].mxu0 %v84
    %v221 = vpop.f32.mrb[0].mxu0
    %v222 = vadd.f32 0.0, %v221
    %v223 = vpop.f32.mrb[0].mxu0
    %224 = vmatprep.mubr.f32.mxu0 0.0
    %225 = vmatmul.mubr.f32.gmra.mrb[0].mxu0 %v87
    %v226 = vpop.f32.mrb[0].mxu0
    %v227 = vadd.f32 0.0, %v226
    %v228 = vpop.f32.mrb[0].mxu0
    %229 = vmatprep.mubr.f32.mxu0 0.0
    %230 = vmatmul.mubr.f32.gmra.mrb[0].mxu0 %v90
    %v231 = vpop.f32.mrb[0].mxu0
    %v232 = vadd.f32 0.0, %v231
    %v233 = vpop.f32.mrb[0].mxu0
    %234 = vmatprep.mubr.f32.mxu0 0.0
    %235 = vmatmul.mubr.f32.gmra.mrb[0].mxu0 %v93
    %v236 = vpop.f32.mrb[0].mxu0
    %v237 = vadd.f32 0.0, %v236
    %v238 = vpop.f32.mrb[0].mxu0
    %239 = vmatprep.mubr.f32.mxu0 0.0
    %240 = vmatmul.mubr.f32.gmra.mrb[0].mxu0 %v96
    %v241 = vpop.f32.mrb[0].mxu0
    %v242 = vadd.f32 0.0, %v241
    %v243 = vpop.f32.mrb[0].mxu0
    %244 = vmatprep.mubr.f32.mxu0 0.0
    %245 = vmatmul.mubr.f32.gmra.mrb[0].mxu0 %v99
    %v246 = vpop.f32.mrb[0].mxu0
    %v247 = vadd.f32 0.0, %v246
    %v248 = vpop.f32.mrb[0].mxu0
    %249 = vmatprep.mubr.f32.mxu0 0.0
    %250 = vmatmul.mubr.f32.gmra.mrb[0].mxu0 %v102
    %v251 = vpop.f32.mrb[0].mxu0
    %v252 = vadd.f32 0.0, %v251
    %v253 = vpop.f32.mrb[0].mxu0
    %254 = vdwg.mxu0
    %vm255 = vcmask 130048
    %v256 = vsel %vm255, %v177, -inf
    %257 = vmax.xlane.f32.xlu0 %v256
    %v258 = vpop.xlane.xlu0 %257
    %v259 = vsel %vm255, %v182, -inf
    %260 = vmax.xlane.f32.xlu0 %v259
    %v261 = vpop.xlane.xlu0 %260
    %v262 = vsel %vm255, %v187, -inf
    %263 = vmax.xlane.f32.xlu0 %v262
    %v264 = vpop.xlane.xlu0 %263
    %v265 = vsel %vm255, %v192, -inf
    %266 = vmax.xlane.f32.xlu0 %v265
    %v267 = vpop.xlane.xlu0 %266
    %v268 = vsel %vm255, %v197, -inf
    %269 = vmax.xlane.f32.xlu0 %v268
    %v270 = vpop.xlane.xlu0 %269
    %v271 = vsel %vm255, %v202, -inf
    %272 = vmax.xlane.f32.xlu0 %v271
    %v273 = vpop.xlane.xlu0 %272
    %v274 = vsel %vm255, %v207, -inf
    %275 = vmax.xlane.f32.xlu0 %v274
    %v276 = vpop.xlane.xlu0 %275
    %v277 = vsel %vm255, %v212, -inf
    %278 = vmax.xlane.f32.xlu0 %v277
    %v279 = vpop.xlane.xlu0 %278
    %v280 = vsel %vm255, %v217, -inf
    %281 = vmax.xlane.f32.xlu0 %v280
    %v282 = vpop.xlane.xlu0 %281
    %v283 = vsel %vm255, %v222, -inf
    %284 = vmax.xlane.f32.xlu0 %v283
    %v285 = vpop.xlane.xlu0 %284
    %v286 = vsel %vm255, %v227, -inf
    %287 = vmax.xlane.f32.xlu0 %v286
    %v288 = vpop.xlane.xlu0 %287
    %v289 = vsel %vm255, %v232, -inf
    %290 = vmax.xlane.f32.xlu0 %v289
    %v291 = vpop.xlane.xlu0 %290
    %v292 = vsel %vm255, %v237, -inf
    %293 = vmax.xlane.f32.xlu0 %v292
    %v294 = vpop.xlane.xlu0 %293
    %v295 = vsel %vm255, %v242, -inf
    %296 = vmax.xlane.f32.xlu0 %v295
    %v297 = vpop.xlane.xlu0 %296
    %v298 = vsel %vm255, %v247, -inf
    %299 = vmax.xlane.f32.xlu0 %v298
    %v300 = vpop.xlane.xlu0 %299
    %v301 = vsel %vm255, %v252, -inf
    %302 = vmax.xlane.f32.xlu0 %v301
    %v303 = vpop.xlane.xlu0 %302
    %v304 = vsub.f32 %v177, %v258
    %v305 = vsub.f32 %v182, %v261
    %v306 = vsub.f32 %v187, %v264
    %v307 = vsub.f32 %v192, %v267
    %v308 = vsub.f32 %v197, %v270
    %v309 = vsub.f32 %v202, %v273
    %v310 = vsub.f32 %v207, %v276
    %v311 = vsub.f32 %v212, %v279
    %v312 = vsub.f32 %v217, %v282
    %v313 = vsub.f32 %v222, %v285
    %v314 = vsub.f32 %v227, %v288
    %v315 = vsub.f32 %v232, %v291
    %v316 = vsub.f32 %v237, %v294
    %v317 = vsub.f32 %v242, %v297
    %v318 = vsub.f32 %v247, %v300
    %v319 = vsub.f32 %v252, %v303
    %v320 = vmul.f32 %v304, 1.442695
    %v321 = vpow.pop %v320
    %v322 = vmul.f32 %v305, 1.442695
    %v323 = vpow.pop %v322
    %v324 = vmul.f32 %v306, 1.442695
    %v325 = vpow.pop %v324
    %v326 = vmul.f32 %v307, 1.442695
    %v327 = vpow.pop %v326
    %v328 = vmul.f32 %v308, 1.442695
    %v329 = vpow.pop %v328
    %v330 = vmul.f32 %v309, 1.442695
    %v331 = vpow.pop %v330
    %v332 = vmul.f32 %v310, 1.442695
    %v333 = vpow.pop %v332
    %v334 = vmul.f32 %v311, 1.442695
    %v335 = vpow.pop %v334
    %v336 = vmul.f32 %v312, 1.442695
    %v337 = vpow.pop %v336
    %v338 = vmul.f32 %v313, 1.442695
    %v339 = vpow.pop %v338
    %v340 = vmul.f32 %v314, 1.442695
    %v341 = vpow.pop %v340
    %v342 = vmul.f32 %v315, 1.442695
    %v343 = vpow.pop %v342
    %v344 = vmul.f32 %v316, 1.442695
    %v345 = vpow.pop %v344
    %v346 = vmul.f32 %v317, 1.442695
    %v347 = vpow.pop %v346
    %v348 = vmul.f32 %v318, 1.442695
    %v349 = vpow.pop %v348
    %v350 = vmul.f32 %v319, 1.442695
    %v351 = vpow.pop %v350
    %v352 = vsel %vm255, %v321, 0.0
    %353 = vadd.xlane.f32.xlu0 %v352
    %v354 = vpop.xlane.xlu0 %353
    %v355 = vsel %vm255, %v323, 0.0
    %356 = vadd.xlane.f32.xlu0 %v355
    %v357 = vpop.xlane.xlu0 %356
    %v358 = vsel %vm255, %v325, 0.0
    %359 = vadd.xlane.f32.xlu0 %v358
    %v360 = vpop.xlane.xlu0 %359
    %v361 = vsel %vm255, %v327, 0.0
    %362 = vadd.xlane.f32.xlu0 %v361
    %v363 = vpop.xlane.xlu0 %362
    %v364 = vsel %vm255, %v329, 0.0
    %365 = vadd.xlane.f32.xlu0 %v364
    %v366 = vpop.xlane.xlu0 %365
    %v367 = vsel %vm255, %v331, 0.0
    %368 = vadd.xlane.f32.xlu0 %v367
    %v369 = vpop.xlane.xlu0 %368
    %v370 = vsel %vm255, %v333, 0.0
    %371 = vadd.xlane.f32.xlu0 %v370
    %v372 = vpop.xlane.xlu0 %371
    %v373 = vsel %vm255, %v335, 0.0
    %374 = vadd.xlane.f32.xlu0 %v373
    %v375 = vpop.xlane.xlu0 %374
    %v376 = vsel %vm255, %v337, 0.0
    %377 = vadd.xlane.f32.xlu0 %v376
    %v378 = vpop.xlane.xlu0 %377
    %v379 = vsel %vm255, %v339, 0.0
    %380 = vadd.xlane.f32.xlu0 %v379
    %v381 = vpop.xlane.xlu0 %380
    %v382 = vsel %vm255, %v341, 0.0
    %383 = vadd.xlane.f32.xlu0 %v382
    %v384 = vpop.xlane.xlu0 %383
    %v385 = vsel %vm255, %v343, 0.0
    %386 = vadd.xlane.f32.xlu0 %v385
    %v387 = vpop.xlane.xlu0 %386
    %v388 = vsel %vm255, %v345, 0.0
    %389 = vadd.xlane.f32.xlu0 %v388
    %v390 = vpop.xlane.xlu0 %389
    %v391 = vsel %vm255, %v347, 0.0
    %392 = vadd.xlane.f32.xlu0 %v391
    %v393 = vpop.xlane.xlu0 %392
    %v394 = vsel %vm255, %v349, 0.0
    %395 = vadd.xlane.f32.xlu0 %v394
    %v396 = vpop.xlane.xlu0 %395
    %v397 = vsel %vm255, %v351, 0.0
    %398 = vadd.xlane.f32.xlu0 %v397
    %v399 = vpop.xlane.xlu0 %398
    %v400 = vrcp.pop %v354
    %v401 = vrcp.pop %v357
    %v402 = vrcp.pop %v360
    %v403 = vrcp.pop %v363
    %v404 = vrcp.pop %v366
    %v405 = vrcp.pop %v369
    %v406 = vrcp.pop %v372
    %v407 = vrcp.pop %v375
    %v408 = vrcp.pop %v378
    %v409 = vrcp.pop %v381
    %v410 = vrcp.pop %v384
    %v411 = vrcp.pop %v387
    %v412 = vrcp.pop %v390
    %v413 = vrcp.pop %v393
    %v414 = vrcp.pop %v396
    %v415 = vrcp.pop %v399
    %v416 = vmul.f32 %v321, %v400
    %v417 = vmul.f32 %v323, %v401
    %v418 = vmul.f32 %v325, %v402
    %v419 = vmul.f32 %v327, %v403
    %v420 = vmul.f32 %v329, %v404
    %v421 = vmul.f32 %v331, %v405
    %v422 = vmul.f32 %v333, %v406
    %v423 = vmul.f32 %v335, %v407
    %v424 = vmul.f32 %v337, %v408
    %v425 = vmul.f32 %v339, %v409
    %v426 = vmul.f32 %v341, %v410
    %v427 = vmul.f32 %v343, %v411
    %v428 = vmul.f32 %v345, %v412
    %v429 = vmul.f32 %v347, %v413
    %v430 = vmul.f32 %v349, %v414
    %v431 = vmul.f32 %v351, %v415
    %v432 = vld [vmem:[%s2] sm:$0xf]
    %v434 = vsel %vm255, %v432, 0
    %v437 = vsel %vm255, %v416, 0
    %v440 = vsel %vm255, %v417, 0
    %v443 = vsel %vm255, %v418, 0
    %v446 = vsel %vm255, %v419, 0
    %v449 = vsel %vm255, %v420, 0
    %v452 = vsel %vm255, %v421, 0
    %v455 = vsel %vm255, %v422, 0
    %v458 = vsel %vm255, %v423, 0
    %v461 = vsel %vm255, %v424, 0
    %v464 = vsel %vm255, %v425, 0
    %v467 = vsel %vm255, %v426, 0
    %v470 = vsel %vm255, %v427, 0
    %v473 = vsel %vm255, %v428, 0
    %v476 = vsel %vm255, %v429, 0
    %v479 = vsel %vm255, %v430, 0
    %v482 = vsel %vm255, %v431, 0
    %484 = vmatprep.subr.mxu0 0.0
    %485 = vmatpush1.xpose.msra.mxu0 %v437
    %486 = vmatprep.subr.mxu0 0.0
    %487 = vmatpush1.xpose.msra.mxu0 %v440
    %488 = vmatprep.subr.mxu0 0.0
    %489 = vmatpush1.xpose.msra.mxu0 %v443
    %490 = vmatprep.subr.mxu0 0.0
    %491 = vmatpush1.xpose.msra.mxu0 %v446
    %492 = vmatprep.subr.mxu0 0.0
    %493 = vmatpush1.xpose.msra.mxu0 %v449
    %494 = vmatprep.subr.mxu0 0.0
    %495 = vmatpush1.xpose.msra.mxu0 %v452
    %496 = vmatprep.subr.mxu0 0.0
    %497 = vmatpush1.xpose.msra.mxu0 %v455
    %498 = vmatprep.subr.mxu0 0.0
    %499 = vmatpush1.xpose.msra.mxu0 %v458
    %500 = vmatprep.subr.mxu0 0.0
    %501 = vmatpush1.xpose.msra.mxu0 %v461
    %502 = vmatprep.subr.mxu0 0.0
    %503 = vmatpush1.xpose.msra.mxu0 %v464
    %504 = vmatprep.subr.mxu0 0.0
    %505 = vmatpush1.xpose.msra.mxu0 %v467
    %506 = vmatprep.subr.mxu0 0.0
    %507 = vmatpush1.xpose.msra.mxu0 %v470
    %508 = vmatprep.subr.mxu0 0.0
    %509 = vmatpush1.xpose.msra.mxu0 %v473
    %510 = vmatprep.subr.mxu0 0.0
    %511 = vmatpush1.xpose.msra.mxu0 %v476
    %512 = vmatprep.subr.mxu0 0.0
    %513 = vmatpush1.xpose.msra.mxu0 %v479
    %514 = vmatprep.subr.mxu0 0.0
    %515 = vmatpush1.xpose.msra.mxu0 %v482
    %516 = vmatprep.subr.mxu0 0.0
    %517 = vmatpush1.xpose.msra.mxu0 0.0
    %518 = vmatprep.subr.mxu0 0.0
    %519 = vmatpush1.xpose.msra.mxu0 0.0
    %520 = vmatprep.subr.mxu0 0.0
    %521 = vmatpush1.xpose.msra.mxu0 0.0
    %522 = vmatprep.subr.mxu0 0.0
    %523 = vmatpush1.xpose.msra.mxu0 0.0
    %524 = vmatprep.subr.mxu0 0.0
    %525 = vmatpush1.xpose.msra.mxu0 0.0
    %526 = vmatprep.subr.mxu0 0.0
    %527 = vmatpush1.xpose.msra.mxu0 0.0
    %528 = vmatprep.subr.mxu0 0.0
    %529 = vmatpush1.xpose.msra.mxu0 0.0
    %530 = vmatprep.subr.mxu0 0.0
    %531 = vmatpush1.xpose.msra.mxu0 0.0
    %532 = vmatprep.subr.mxu0 0.0
    %533 = vmatpush1.xpose.msra.mxu0 0.0
    %534 = vmatprep.subr.mxu0 0.0
    %535 = vmatpush1.xpose.msra.mxu0 0.0
    %536 = vmatprep.subr.mxu0 0.0
    %537 = vmatpush1.xpose.msra.mxu0 0.0
    %538 = vmatprep.subr.mxu0 0.0
    %539 = vmatpush1.xpose.msra.mxu0 0.0
    %540 = vmatprep.subr.mxu0 0.0
    %541 = vmatpush1.xpose.msra.mxu0 0.0
    %542 = vmatprep.subr.mxu0 0.0
    %543 = vmatpush1.xpose.msra.mxu0 0.0
    %544 = vmatprep.subr.mxu0 0.0
    %545 = vmatpush1.xpose.msra.mxu0 0.0
    %546 = vmatprep.subr.mxu0 0.0
    %547 = vmatpush1.xpose.msra.mxu0 0.0
    %548 = vmatprep.mubr.f32.mxu0 0.0
    %549 = vmatmul.mubr.f32.gmra.mrb[0].mxu0 %v434
    %v550 = vpop.f32.mrb[0].mxu0
    %v551 = vadd.f32 0.0, %v550
    %v552 = vpop.f32.mrb[0].mxu0
    %553 = vdwg.mxu0
    %v554 = vld [vmem:[%s4] sm:$0x1]
    %v555 = vld [vmem:[%s3] sm:$0x1]
    %v557 = vlaneseq
    %v558 = vshrl.u32 %v557, 7
    %v559 = vsub.s32 0, %v558
    %v560 = vrot.slane %v555, %v559
    %v562 = vmul.f32 %v560, %v551
    %v564 = vlaneseq
    %v565 = vshrl.u32 %v564, 7
    %v566 = vsub.s32 0, %v565
    %v567 = vrot.slane %v554, %v566
    %v569 = vadd.f32 %v567, %v562
    %570 = vst [vmem:[#allocation2] sm:$0xf] %v569
    // Predicated region
    $region22: #{tpu_custom_call.1} parent=1 // pred_check
      _
    $region23: #{tpu_custom_call.1} parent=1 // pred_check_branch
      %572 = sbr.rel (0) target = $region25
    $region24: #{tpu_custom_call.1} parent=1 // pred_region
      %s574 = ssub.s32 64, 64
      %575 = vsyncadd [#allocation3], %s574
      %s577 = sshll.u32 [#allocation2], 4
      %s578 = int_to_ptr.vmem [resolvable:$true] %s577
      %580 = dma.vmem_to_hbm [thread:$0]  %s578, 64, %s5, [#allocation3]
    $region25: #{tpu_custom_call.1} parent=1 // pred_fallthru
      _
    // Predicated region
    $region26: #{tpu_custom_call.1} parent=1 // pred_check
      _
    $region27: #{tpu_custom_call.1} parent=1 // pred_check_branch
      %582 = sbr.rel (0) target = $region29
    $region28: #{tpu_custom_call.1} parent=1 // pred_region
      %583 = dma.done [#allocation3], 64
    $region29: #{tpu_custom_call.1} parent=1 // pred_fallthru
      _
    %584 = vsyncpa [#allocation3], 1

</llo_original>
